<compile_context>
chip_gen: v7x
topology: tpu7x:2x2x1
jax: 0.10.0
libtpu: 0.0.40
codegen_flags: <defaults>
</compile_context>

<pallas_src>
import functools
import math

import jax
import jax.numpy as jnp
from jax.experimental import pallas as pl
from jax.experimental.pallas import tpu as pltpu

_BN_EPS = 1e-5                 # PyTorch BatchNorm2d default
_LN_EPS = 1e-5                 # PyTorch LayerNorm default
_TM_MAX = 512                  # pointwise rows per tile
_VMEM_LIMIT = 32 * 1024 * 1024  # safe on v5e/v6e/v7x


def _gelu(x):
    # TODO(synk): PyTorch nn.GELU defaults to the exact erf form; the tanh
    # approximation is used to guarantee Mosaic lowering.
    return jax.nn.gelu(x, approximate=True)


# ----------------------------------------------------------------------------
# Fused pointwise (1x1-conv / linear) kernel, M-tiled:
#   y = x @ W + b   [bf16 MXU inputs, f32 accumulate]
#   -> optional GELU -> optional elementwise gate (LKA) ->
#   optional second matmul (proj_2) -> optional scaled residual
#   (y + res*res_scale; layer-scale + BN shortcut folded into res_scale) ->
#   optional fused LayerNorm over channels.
# Weights / biases use constant index_maps so they stay VMEM-resident.
# ----------------------------------------------------------------------------
def _make_pw_kernel(gelu, has_mul, second, has_res, has_ln):
    def kernel(*refs):
        *in_refs, o_ref = refs
        it = iter(in_refs)
        x = next(it)[...].astype(jnp.bfloat16)
        w = next(it)[...]
        b = next(it)[...]
        y = jnp.dot(x, w, preferred_element_type=jnp.float32) + b
        if gelu:
            y = _gelu(y)
        if has_mul:
            y = y * next(it)[...]
        if second:
            w2 = next(it)[...]
            b2 = next(it)[...]
            y = jnp.dot(y.astype(jnp.bfloat16), w2,
                        preferred_element_type=jnp.float32) + b2
        if has_res:
            rs = next(it)[...]
            r = next(it)[...]
            y = y + r * rs
        if has_ln:
            g = next(it)[...]
            beta = next(it)[...]
            mu = jnp.mean(y, axis=-1, keepdims=True)
            var = jnp.mean(jnp.square(y - mu), axis=-1, keepdims=True)
            y = (y - mu) * jax.lax.rsqrt(var + _LN_EPS) * g + beta
        o_ref[...] = y

    return kernel


@functools.lru_cache(maxsize=None)
def _pw_callable(M, K, N1, N2, TM, gelu, has_mul, second, has_res, has_ln):
    Nout = N2 if second else N1
    specs = [
        pl.BlockSpec((TM, K), lambda i: (i, 0)),       # activations: tiled over M
        pl.BlockSpec((K, N1), lambda i: (0, 0)),       # weight: resident
        pl.BlockSpec((1, N1), lambda i: (0, 0)),       # bias: resident
    ]
    if has_mul:
        specs.append(pl.BlockSpec((TM, N1), lambda i: (i, 0)))
    if second:
        specs.append(pl.BlockSpec((N1, N2), lambda i: (0, 0)))
        specs.append(pl.BlockSpec((1, N2), lambda i: (0, 0)))
    if has_res:
        specs.append(pl.BlockSpec((1, Nout), lambda i: (0, 0)))
        specs.append(pl.BlockSpec((TM, Nout), lambda i: (i, 0)))
    if has_ln:
        specs.append(pl.BlockSpec((1, Nout), lambda i: (0, 0)))
        specs.append(pl.BlockSpec((1, Nout), lambda i: (0, 0)))
    kernel = _make_pw_kernel(gelu, has_mul, second, has_res, has_ln)
    return pl.pallas_call(
        kernel,
        out_shape=jax.ShapeDtypeStruct((M, Nout), jnp.float32),
        grid=(pl.cdiv(M, TM),),
        in_specs=specs,
        out_specs=pl.BlockSpec((TM, Nout), lambda i: (i, 0)),
        compiler_params=pltpu.CompilerParams(
            dimension_semantics=("parallel",),
            vmem_limit_bytes=_VMEM_LIMIT),
    )


def pointwise(x, w, b, *, gelu=False, mul=None, second=None, res=None, ln=None):
    M, K = x.shape
    N1 = w.shape[1]
    N2 = second[0].shape[1] if second is not None else N1
    TM = M if M <= _TM_MAX else _TM_MAX
    inputs = [x, w, b]
    if mul is not None:
        inputs.append(mul)
    if second is not None:
        inputs += [second[0], second[1]]
    if res is not None:
        inputs += [res[0], res[1]]
    if ln is not None:
        inputs += [ln[0], ln[1]]
    fn = _pw_callable(M, K, N1, N2, TM, bool(gelu), mul is not None,
                      second is not None, res is not None, ln is not None)
    return fn(*inputs)


# ----------------------------------------------------------------------------
# Fused LKA spatial chain: dw 5x5 (pad 2) -> dw 7x7 dilation 3 (pad 9),
# one batch element per grid step ("parallel" across cores).  The dw5 output
# is zero-padded into a VMEM scratch so the dw7 runs without an HBM round trip.
# Per-tap windows are loaded directly from the refs to bound live ranges.
# ----------------------------------------------------------------------------
def _make_lka_dw_kernel(H, W, C):
    P2 = 9  # dilation 3 * (7 - 1) // 2

    def kernel(yp_ref, w5_ref, b5_ref, w7_ref, b7_ref, o_ref, pad_ref):
        w5 = w5_ref[...]
        w7 = w7_ref[...]
        acc = jnp.zeros((1, H, W, C), jnp.float32)
        t = 0
        for i in range(5):
            for j in range(5):
                acc = acc + yp_ref[:, i:i + H, j:j + W, :] * w5[t].reshape(1, 1, 1, C)
                t += 1
        a = acc + b5_ref[...].reshape(1, 1, 1, C)

        # zero-padded staging buffer for the dilated 7x7 (re-zeroed every step:
        # safe under megacore sharding of the batch grid axis)
        pad_ref[...] = jnp.zeros_like(pad_ref)
        pad_ref[:, P2:P2 + H, P2:P2 + W, :] = a

        acc2 = jnp.zeros((1, H, W, C), jnp.float32)
        t = 0
        for i in range(7):
            for j in range(7):
                acc2 = acc2 + (pad_ref[:, 3 * i:3 * i + H, 3 * j:3 * j + W, :]
                               * w7[t].reshape(1, 1, 1, C))
                t += 1
        o_ref[...] = acc2 + b7_ref[...].reshape(1, 1, 1, C)

    return kernel


@functools.lru_cache(maxsize=None)
def _lka_dw_callable(B, H, W, C):
    P2 = 9
    kernel = _make_lka_dw_kernel(H, W, C)
    return pl.pallas_call(
        kernel,
        out_shape=jax.ShapeDtypeStruct((B, H, W, C), jnp.float32),
        grid=(B,),
        in_specs=[pl.BlockSpec((1, H + 4, W + 4, C), lambda b: (b, 0, 0, 0)),
                  pl.BlockSpec((25, C), lambda b: (0, 0)),
                  pl.BlockSpec((1, C), lambda b: (0, 0)),
                  pl.BlockSpec((49, C), lambda b: (0, 0)),
                  pl.BlockSpec((1, C), lambda b: (0, 0))],
        out_specs=pl.BlockSpec((1, H, W, C), lambda b: (b, 0, 0, 0)),
        scratch_shapes=[pltpu.VMEM((1, H + 2 * P2, W + 2 * P2, C), jnp.float32)],
        compiler_params=pltpu.CompilerParams(
            dimension_semantics=("parallel",),
            vmem_limit_bytes=_VMEM_LIMIT),
    )


def lka_dw(y_nhwc, w5, b5, w7, b7):
    B, H, W, C = y_nhwc.shape
    yp = jnp.pad(y_nhwc, ((0, 0), (2, 2), (2, 2), (0, 0)))
    return _lka_dw_callable(B, H, W, C)(yp, w5, b5, w7, b7)


# ----------------------------------------------------------------------------
# Plain depthwise conv (3x3, "same") + optional GELU, one batch element per
# grid step.  Per-tap ref window loads as above.
# TODO(synk): at very large resolutions an H-strip (halo) tiling with manual
# DMA would bound VMEM further; batch-grid tiling is sufficient here.
# TODO(synk): stages with C<128 under-fill the 128 lanes in the depthwise /
# elementwise kernels; a W*C lane-packed layout would recover VPU throughput.
# ----------------------------------------------------------------------------
def _make_dw_kernel(H, W, C, k, dil, gelu):
    def kernel(xp_ref, w_ref, b_ref, o_ref):
        w = w_ref[...]
        acc = jnp.zeros((1, H, W, C), jnp.float32)
        t = 0
        for i in range(k):
            for j in range(k):
                oi, oj = i * dil, j * dil
                acc = acc + xp_ref[:, oi:oi + H, oj:oj + W, :] * w[t].reshape(1, 1, 1, C)
                t += 1
        y = acc + b_ref[...].reshape(1, 1, 1, C)
        if gelu:
            y = _gelu(y)
        o_ref[...] = y

    return kernel


@functools.lru_cache(maxsize=None)
def _dw_callable(B, H, W, C, k, dil, gelu):
    pad = dil * (k - 1) // 2
    kernel = _make_dw_kernel(H, W, C, k, dil, gelu)
    return pl.pallas_call(
        kernel,
        out_shape=jax.ShapeDtypeStruct((B, H, W, C), jnp.float32),
        grid=(B,),
        in_specs=[pl.BlockSpec((1, H + 2 * pad, W + 2 * pad, C), lambda b: (b, 0, 0, 0)),
                  pl.BlockSpec((k * k, C), lambda b: (0, 0)),
                  pl.BlockSpec((1, C), lambda b: (0, 0))],
        out_specs=pl.BlockSpec((1, H, W, C), lambda b: (b, 0, 0, 0)),
        compiler_params=pltpu.CompilerParams(
            dimension_semantics=("parallel",),
            vmem_limit_bytes=_VMEM_LIMIT),
    )


def dwconv(x, w, b, k, dil=1, gelu=False):
    B, H, W, C = x.shape
    pad = dil * (k - 1) // 2
    xp = jnp.pad(x, ((0, 0), (pad, pad), (pad, pad), (0, 0)))
    return _dw_callable(B, H, W, C, k, dil, bool(gelu))(xp, w, b)


# ----------------------------------------------------------------------------
# Glue: im2col for the strided patch-embed convs, nearest upsampling.
# ----------------------------------------------------------------------------
def _im2col(x_nchw, k, s, p):
    B, C, H, W = x_nchw.shape
    xp = jnp.pad(x_nchw, ((0, 0), (0, 0), (p, p), (p, p)))
    Ho = (H + 2 * p - k) // s + 1
    Wo = (W + 2 * p - k) // s + 1
    cols = []
    for i in range(k):
        for j in range(k):
            cols.append(xp[:, :, i:i + (Ho - 1) * s + 1:s, j:j + (Wo - 1) * s + 1:s])
    pat = jnp.stack(cols, axis=-1)                       # (B, C, Ho, Wo, k*k)
    pat = pat.transpose(0, 2, 3, 1, 4).reshape(B, Ho, Wo, C * k * k)
    return pat, Ho, Wo


def _upsample2x(x_nhwc):
    return jnp.repeat(jnp.repeat(x_nhwc, 2, axis=1), 2, axis=2)


def _round_up(v, m):
    return ((v + m - 1) // m) * m


# ----------------------------------------------------------------------------
# Model pieces (VAN / MCPANET structure), operating on folded params.
# ----------------------------------------------------------------------------
def van_block(x, p, final_ln=None):
    """VAN block: x += ls1*Attn(BN1(x)); x += ls2*MLP(BN2(x)).  NHWC in/out.
    Eval-mode BN affines and the layer-scales are folded into the weights."""
    B, H, W, C = x.shape
    M = B * H * W
    f = x.reshape(M, C)

    # --- spatial attention with Large-Kernel-Attention gating ---
    y = pointwise(f, p["proj1_w"], p["proj1_b"], gelu=True)          # BN1+proj_1+GELU
    a2 = lka_dw(y.reshape(B, H, W, C), p["w5"], p["b5"], p["w7"], p["b7"])
    # fused: (a2 @ w1 + b1) * y  ->  @ proj_2'  ->  + f * (1 + ls1*s1)
    f = pointwise(a2.reshape(M, C), p["w1"], p["b1"], mul=y,
                  second=(p["proj2_w"], p["proj2_b"]),
                  res=(p["attn_res_scale"], f))

    # --- MLP (BN2 folded into fc1, ls2 folded into fc2, optional fused LN) ---
    h = pointwise(f, p["fc1_w"], p["fc1_b"])
    Hd = p["fc1_w"].shape[1]
    h = dwconv(h.reshape(B, H, W, Hd), p["dw3_w"], p["dw3_b"], 3, 1, gelu=True)
    f = pointwise(h.reshape(M, Hd), p["fc2_w"], p["fc2_b"],
                  res=(p["fc2_res_scale"], f), ln=final_ln)
    return f.reshape(B, H, W, C)


def mcpa_forward(fp, x_nchw, num_classes):
    pe_k, pe_s, pe_p = (7, 3, 3, 3), (4, 2, 2, 2), (3, 1, 1, 1)
    feats = []
    x = x_nchw
    for si, st in enumerate(fp["stages"]):
        pat, Ho, Wo = _im2col(x, pe_k[si], pe_s[si], pe_p[si])
        B = pat.shape[0]
        Kp = pat.shape[-1]
        C = st["patch_w"].shape[1]
        nblk = len(st["blocks"])
        ln = (st["ln_g"], st["ln_b"])
        f = pointwise(pat.reshape(B * Ho * Wo, Kp), st["patch_w"], st["patch_b"],
                      ln=ln if nblk == 0 else None)                  # conv+BN (folded)
        f = f.reshape(B, Ho, Wo, C)
        for bi, bp in enumerate(st["blocks"]):
            f = van_block(f, bp, final_ln=ln if bi == nblk - 1 else None)
        feats.append(f)
        x = f.transpose(0, 3, 1, 2)    # NCHW for the next patch embed

    # TODO(synk): MCPANET's exact decoder / cross-perceptron-attention code is
    # not in the provided source; this follows the up_block/up_norm structure
    # implied by load_from (nearest upsample + channel-reduce + skip + VAN block).
    d = feats[3]
    for idx, si in enumerate((3, 2, 1)):
        up = fp["up"][idx]
        B, Hl, Wl, Cin = d.shape
        Cout = up["reduce_w"].shape[1]
        # channel-reduce at the LOW resolution (upsample commutes with a 1x1 conv)
        red = pointwise(d.reshape(B * Hl * Wl, Cin), up["reduce_w"], up["reduce_b"])
        red = red.reshape(B, Hl, Wl, Cout)
        d = _upsample2x(red) + feats[si - 1]               # nearest up + skip (glue)
        d = van_block(d, up["block"], final_ln=(up["ln_g"], up["ln_b"]))

    B, Hh, Wh, C0 = d.shape
    logits = pointwise(d.reshape(B * Hh * Wh, C0), fp["head_w"], fp["head_b"])
    logits = logits[:, :num_classes].reshape(B, Hh, Wh, num_classes)
    logits = _upsample2x(_upsample2x(logits))              # back to input resolution
    return logits.transpose(0, 3, 1, 2)                    # NCHW


# ----------------------------------------------------------------------------
# Parameter init (PyTorch-like, with BN running stats) and inference-time
# folding (BN -> matmul, layer-scale -> matmul, bf16 weights, padded head).
# ----------------------------------------------------------------------------
def _block_params(nk, C, mlp_ratio=4):
    h = mlp_ratio * C

    def w(shape, fan_in):
        return jax.random.normal(nk(), shape, jnp.float32) / math.sqrt(fan_in)

    z = lambda c: jnp.zeros((1, c), jnp.float32)
    o = lambda c: jnp.ones((1, c), jnp.float32)
    return dict(
        bn1_g=o(C), bn1_b=z(C), bn1_m=z(C), bn1_v=o(C),
        proj1_w=w((C, C), C), proj1_b=z(C),
        w5=w((25, C), 25), b5=z(C),
        w7=w((49, C), 49), b7=z(C),
        w1=w((C, C), C), b1=z(C),
        proj2_w=w((C, C), C), proj2_b=z(C),
        ls1=jnp.full((1, C), 1e-2, jnp.float32),
        bn2_g=o(C), bn2_b=z(C), bn2_m=z(C), bn2_v=o(C),
        fc1_w=w((C, h), C), fc1_b=z(h),
        dw3_w=w((9, h), 9), dw3_b=z(h),
        fc2_w=w((h, C), h), fc2_b=z(C),
        ls2=jnp.full((1, C), 1e-2, jnp.float32),
    )


def init_params(key, in_ch, dims, depths, num_classes, mlp_ratio=4):
    cnt = [0]

    def nk():
        cnt[0] += 1
        return jax.random.fold_in(key, cnt[0])

    def w(shape, fan_in):
        return jax.random.normal(nk(), shape, jnp.float32) / math.sqrt(fan_in)

    # TODO(synk): config.MODEL.SWIN.NUM_HEADS feeds MCPANET internals absent
    # from the provided source; VAN/LKA blocks have no head dimension.
    params = {"stages": [], "up": []}
    prev = in_ch
    pe_k = [7, 3, 3, 3]
    for si, C in enumerate(dims):
        k = pe_k[si]
        params["stages"].append(dict(
            patch=dict(w=w((prev * k * k, C), prev * k * k),
                       b=jnp.zeros((1, C), jnp.float32),
                       bn_g=jnp.ones((1, C), jnp.float32),
                       bn_b=jnp.zeros((1, C), jnp.float32),
                       bn_m=jnp.zeros((1, C), jnp.float32),
                       bn_v=jnp.ones((1, C), jnp.float32)),
            blocks=[_block_params(nk, C, mlp_ratio) for _ in range(depths[si])],
            ln_g=jnp.ones((1, C), jnp.float32),
            ln_b=jnp.zeros((1, C), jnp.float32),
        ))
        prev = C
    for si in (3, 2, 1):
        Cin, Cout = dims[si], dims[si - 1]
        params["up"].append(dict(
            reduce_w=w((Cin, Cout), Cin),
            reduce_b=jnp.zeros((1, Cout), jnp.float32),
            block=_block_params(nk, Cout, mlp_ratio),
            ln_g=jnp.ones((1, Cout), jnp.float32),
            ln_b=jnp.zeros((1, Cout), jnp.float32),
        ))
    params["head_w"] = w((dims[0], num_classes), dims[0])
    params["head_b"] = jnp.zeros((1, num_classes), jnp.float32)
    return params


def _bn_affine(g, b, mean, var, eps=_BN_EPS):
    s = g / jnp.sqrt(var + eps)
    return s, b - mean * s


def _fold_block(p):
    bf = jnp.bfloat16
    s1, t1 = _bn_affine(p["bn1_g"], p["bn1_b"], p["bn1_m"], p["bn1_v"])
    s2, t2 = _bn_affine(p["bn2_g"], p["bn2_b"], p["bn2_m"], p["bn2_v"])
    ls1, ls2 = p["ls1"], p["ls2"]
    return dict(
        # BN1 folded into proj_1 input rows
        proj1_w=(p["proj1_w"] * s1.reshape(-1, 1)).astype(bf),
        proj1_b=p["proj1_b"] + t1 @ p["proj1_w"],
        w5=p["w5"], b5=p["b5"], w7=p["w7"], b7=p["b7"],
        w1=p["w1"].astype(bf), b1=p["b1"],
        # layer-scale ls1 + BN1 attention shortcut folded into proj_2 / residual scale
        proj2_w=(p["proj2_w"] * ls1).astype(bf),
        proj2_b=ls1 * (p["proj2_b"] + t1),
        attn_res_scale=1.0 + ls1 * s1,
        # BN2 folded into fc1, ls2 folded into fc2
        fc1_w=(p["fc1_w"] * s2.reshape(-1, 1)).astype(bf),
        fc1_b=p["fc1_b"] + t2 @ p["fc1_w"],
        dw3_w=p["dw3_w"], dw3_b=p["dw3_b"],
        fc2_w=(p["fc2_w"] * ls2).astype(bf),
        fc2_b=ls2 * p["fc2_b"],
        fc2_res_scale=jnp.ones_like(ls2),
    )


def fold_params(params):
    bf = jnp.bfloat16
    fp = {"stages": [], "up": []}
    for st in params["stages"]:
        pe = st["patch"]
        s, t = _bn_affine(pe["bn_g"], pe["bn_b"], pe["bn_m"], pe["bn_v"])
        fp["stages"].append(dict(
            patch_w=(pe["w"] * s).astype(bf),
            patch_b=pe["b"] * s + t,
            blocks=[_fold_block(bp) for bp in st["blocks"]],
            ln_g=st["ln_g"], ln_b=st["ln_b"],
        ))
    for up in params["up"]:
        fp["up"].append(dict(
            reduce_w=up["reduce_w"].astype(bf),
            reduce_b=up["reduce_b"],
            block=_fold_block(up["block"]),
            ln_g=up["ln_g"], ln_b=up["ln_b"],
        ))
    # lane-dense head: pad num_classes up to a multiple of 128
    C0, ncls = params["head_w"].shape
    npad = _round_up(ncls, 128)
    hw = jnp.zeros((C0, npad), jnp.float32).at[:, :ncls].set(params["head_w"])
    hb = jnp.zeros((1, npad), jnp.float32).at[:, :ncls].set(params["head_b"])
    fp["head_w"] = hw.astype(bf)
    fp["head_b"] = hb
    return fp


if __name__ == "__main__":
    key = jax.random.PRNGKey(0)
    B, Cin, H, W = 2, 3, 32, 32
    num_classes = 4
    dims = (16, 32, 64, 128)     # config.MODEL.SWIN.EMBED_DIM (small test sizes)
    depths = (1, 1, 1, 1)        # config.MODEL.SWIN.DEPTHS   (small test sizes)

    raw_params = init_params(jax.random.fold_in(key, 0), Cin, dims, depths, num_classes)
    params = fold_params(raw_params)
    x = jax.random.normal(jax.random.fold_in(key, 9999), (B, Cin, H, W), jnp.float32)

    out = mcpa_forward(params, x, num_classes)
    out = jax.block_until_ready(out)

    assert out.shape == (B, num_classes, H, W), out.shape
    assert bool(jnp.all(jnp.isfinite(out)))
    print("KERNEL_OK")
</pallas_src>

<mosaic_0001>
module attributes {stable_mosaic.version = 11 : i64} {
  func.func @kernel(%arg0: i32, %arg1: memref<128x147xf32, #tpu.memory_space<vmem>>, %arg2: memref<147x16xbf16, #tpu.memory_space<vmem>>, %arg3: memref<1x16xf32, #tpu.memory_space<vmem>>, %arg4: memref<128x16xf32, #tpu.memory_space<vmem>>) attributes {dimension_semantics = [#tpu.dimension_semantics<parallel>], iteration_bounds = array<i64: 1>, scalar_prefetch = 0 : i64, scratch_operands = 0 : i64, tpu.core_type = #tpu.core_type<tc>, window_params = [{transform_indices = @transform_0, window_bounds = array<i64: 128, 147>}, {pipeline_mode = #tpu.pipeline_mode<synchronous>, transform_indices = @transform_1, window_bounds = array<i64: 147, 16>}, {pipeline_mode = #tpu.pipeline_mode<synchronous>, transform_indices = @transform_2, window_bounds = array<i64: 1, 16>}, {transform_indices = @transform_3, window_bounds = array<i64: 128, 16>}]} {
    %c0 = arith.constant 0 : index
    %c0_0 = arith.constant 0 : index
    %0 = vector.load %arg1[%c0, %c0_0] : memref<128x147xf32, #tpu.memory_space<vmem>>, vector<128x147xf32>
    %1 = arith.truncf %0 : vector<128x147xf32> to vector<128x147xbf16>
    %c0_1 = arith.constant 0 : index
    %c0_2 = arith.constant 0 : index
    %2 = vector.load %arg2[%c0_1, %c0_2] : memref<147x16xbf16, #tpu.memory_space<vmem>>, vector<147x16xbf16>
    %c0_3 = arith.constant 0 : index
    %c0_4 = arith.constant 0 : index
    %3 = vector.load %arg3[%c0_3, %c0_4] : memref<1x16xf32, #tpu.memory_space<vmem>>, vector<1x16xf32>
    %cst = arith.constant dense<0.000000e+00> : vector<128x16xf32>
    %4 = tpu.matmul %1, %2, %cst {dimension_numbers = #tpu.dot_dimension_numbers<[1], [0], [0], [1], [0, 0, 1, 1], [], []>} : vector<128x147xbf16>, vector<147x16xbf16>, vector<128x16xf32> -> vector<128x16xf32>
    %5 = vector.broadcast %3 : vector<1x16xf32> to vector<128x16xf32>
    %6 = arith.addf %4, %5 : vector<128x16xf32>
    %c0_5 = arith.constant 0 : index
    %c0_6 = arith.constant 0 : index
    %7 = vector.load %arg4[%c0_5, %c0_6] : memref<128x16xf32, #tpu.memory_space<vmem>>, vector<128x16xf32>
    tpu.vector_store %arg4[%c0_5, %c0_6], %6 {strides = array<i32>} : memref<128x16xf32, #tpu.memory_space<vmem>>, vector<128x16xf32>,
    return
  }
  func.func @transform_0(%arg0: i32) -> (i32, i32) {
    %c0_i32 = arith.constant 0 : i32
    %c0_i32_0 = arith.constant 0 : i32
    return %arg0, %c0_i32 : i32, i32
  }
  func.func @transform_1(%arg0: i32) -> (i32, i32) {
    %c0_i32 = arith.constant 0 : i32
    %c0_i32_0 = arith.constant 0 : i32
    %c0_i32_1 = arith.constant 0 : i32
    return %c0_i32, %c0_i32_0 : i32, i32
  }
  func.func @transform_2(%arg0: i32) -> (i32, i32) {
    %c0_i32 = arith.constant 0 : i32
    %c0_i32_0 = arith.constant 0 : i32
    %c0_i32_1 = arith.constant 0 : i32
    return %c0_i32, %c0_i32_0 : i32, i32
  }
  func.func @transform_3(%arg0: i32) -> (i32, i32) {
    %c0_i32 = arith.constant 0 : i32
    %c0_i32_0 = arith.constant 0 : i32
    return %arg0, %c0_i32 : i32, i32
  }
}

</mosaic_0001>

<llo_original>
// kernel: tpu_custom_call.1
$region0: #{tpu_custom_call.1}
  #allocation0 [shape = 'u32[]', space=smem, size = 0x4, offset = 0x4, fixed_abs, tag = 'smem constant byte address 0x4 - core index']
  #allocation1 [shape = 'u32[144,128]{1,0:T(1,128)}', space=vmem, size = 0x12000, scoped, tag = 'internal scratch']
  %s0 = inlined_call_operand.vmem [shape: f32[128,147], index: 0, kind: input, shape index: {}]
  %s1 = inlined_call_operand.vmem [shape: bf16[147,16], index: 1, kind: input, shape index: {}]
  %s2 = inlined_call_operand.vmem [shape: f32[1,16], index: 2, kind: input, shape index: {}]
  %s3 = inlined_call_operand.vmem [shape: f32[128,16], index: 3, kind: output, shape index: {}]
  %s4 = sld [smem:[#allocation0]]
  $region22: #{tpu_custom_call.1} parent=0
    _
  %s6 = ssub.s32 1, %s4
  %s7 = scalar_select 0, %s6, %s4
  // Predicated region
  $region2: #{tpu_custom_call.1} parent=0 // pred_check
    _
  $region3: #{tpu_custom_call.1} parent=0 // pred_check_branch
    %9 = sbr.rel (0) target = $region5
  $region4: #{tpu_custom_call.1} parent=0 // pred_region
    _
  $region5: #{tpu_custom_call.1} parent=0 // pred_fallthru
    _
  // Predicated region
  $region6: #{tpu_custom_call.1} parent=0 // pred_check
    _
  $region7: #{tpu_custom_call.1} parent=0 // pred_check_branch
    %11 = sbr.rel (0) target = $region9
  $region8: #{tpu_custom_call.1} parent=0 // pred_region
    _
  $region9: #{tpu_custom_call.1} parent=0 // pred_fallthru
    _
  // Predicated region
  $region10: #{tpu_custom_call.1} parent=0 // pred_check
    _
  $region11: #{tpu_custom_call.1} parent=0 // pred_check_branch
    %13 = sbr.rel (0) target = $region13
  $region12: #{tpu_custom_call.1} parent=0 // pred_region
    _
  $region13: #{tpu_custom_call.1} parent=0 // pred_fallthru
    _
  %v15 = vld [vmem:[%s0] sm:$0xff]
  %v16 = vld [vmem:[%s0 + $0x8] sm:$0xff]
  %v17 = vld [vmem:[%s0 + $0x10] sm:$0xff]
  %v18 = vld [vmem:[%s0 + $0x18] sm:$0xff]
  %v19 = vld [vmem:[%s0 + $0x20] sm:$0xff]
  %v20 = vld [vmem:[%s0 + $0x28] sm:$0xff]
  %v21 = vld [vmem:[%s0 + $0x30] sm:$0xff]
  %v22 = vld [vmem:[%s0 + $0x38] sm:$0xff]
  %v23 = vld [vmem:[%s0 + $0x40] sm:$0xff]
  %v24 = vld [vmem:[%s0 + $0x48] sm:$0xff]
  %v25 = vld [vmem:[%s0 + $0x50] sm:$0xff]
  %v26 = vld [vmem:[%s0 + $0x58] sm:$0xff]
  %v27 = vld [vmem:[%s0 + $0x60] sm:$0xff]
  %v28 = vld [vmem:[%s0 + $0x68] sm:$0xff]
  %v29 = vld [vmem:[%s0 + $0x70] sm:$0xff]
  %v30 = vld [vmem:[%s0 + $0x78] sm:$0xff]
  %v31 = vld [vmem:[%s0 + $0x80] sm:$0xff]
  %v32 = vld [vmem:[%s0 + $0x88] sm:$0xff]
  %v33 = vld [vmem:[%s0 + $0x90] sm:$0xff]
  %v34 = vld [vmem:[%s0 + $0x98] sm:$0xff]
  %v35 = vld [vmem:[%s0 + $0xa0] sm:$0xff]
  %v36 = vld [vmem:[%s0 + $0xa8] sm:$0xff]
  %v37 = vld [vmem:[%s0 + $0xb0] sm:$0xff]
  %v38 = vld [vmem:[%s0 + $0xb8] sm:$0xff]
  %v39 = vld [vmem:[%s0 + $0xc0] sm:$0xff]
  %v40 = vld [vmem:[%s0 + $0xc8] sm:$0xff]
  %v41 = vld [vmem:[%s0 + $0xd0] sm:$0xff]
  %v42 = vld [vmem:[%s0 + $0xd8] sm:$0xff]
  %v43 = vld [vmem:[%s0 + $0xe0] sm:$0xff]
  %v44 = vld [vmem:[%s0 + $0xe8] sm:$0xff]
  %v45 = vld [vmem:[%s0 + $0xf0] sm:$0xff]
  %v46 = vld [vmem:[%s0 + $0xf8] sm:$0xff]
  %v47 = vpack.c.bf16 %v17, %v15
  %v48 = vpack.c.bf16 %v18, %v16
  %v49 = vpack.c.bf16 %v21, %v19
  %v50 = vpack.c.bf16 %v22, %v20
  %v51 = vpack.c.bf16 %v25, %v23
  %v52 = vpack.c.bf16 %v26, %v24
  %v53 = vpack.c.bf16 %v29, %v27
  %v54 = vpack.c.bf16 %v30, %v28
  %v55 = vpack.c.bf16 %v33, %v31
  %v56 = vpack.c.bf16 %v34, %v32
  %v57 = vpack.c.bf16 %v37, %v35
  %v58 = vpack.c.bf16 %v38, %v36
  %v59 = vpack.c.bf16 %v41, %v39
  %v60 = vpack.c.bf16 %v42, %v40
  %v61 = vpack.c.bf16 %v45, %v43
  %v62 = vpack.c.bf16 %v46, %v44
  %v63 = vld [vmem:[%s1] sm:$0xf]
  %v64 = vld [vmem:[%s1 + $0x4] sm:$0xf]
  %v65 = vld [vmem:[%s1 + $0x8] sm:$0xf]
  %v66 = vld [vmem:[%s1 + $0xc] sm:$0xf]
  %v67 = vld [vmem:[%s1 + $0x10] sm:$0xf]
  %v68 = vld [vmem:[%s1 + $0x14] sm:$0xf]
  %v69 = vld [vmem:[%s1 + $0x18] sm:$0xf]
  %v70 = vld [vmem:[%s1 + $0x1c] sm:$0xf]
  %v71 = vld [vmem:[%s1 + $0x20] sm:$0xf]
  %v72 = vld [vmem:[%s1 + $0x24] sm:$0xf]
  %v73 = vld [vmem:[%s1 + $0x28] sm:$0xf]
  %v74 = vld [vmem:[%s1 + $0x2c] sm:$0xf]
  %v75 = vld [vmem:[%s1 + $0x30] sm:$0xf]
  %v76 = vld [vmem:[%s1 + $0x34] sm:$0xf]
  %v77 = vld [vmem:[%s1 + $0x38] sm:$0xf]
  %v78 = vld [vmem:[%s1 + $0x3c] sm:$0xf]
  %v79 = vld [vmem:[%s1 + $0x40] sm:$0xf]
  %v80 = vld [vmem:[%s1 + $0x44] sm:$0xf]
  %v81 = vld [vmem:[%s1 + $0x48] sm:$0x3]
  %v82 = vld [vmem:[%s2] sm:$0x1]
  %v84 = vlaneseq
  %v85 = vshrl.u32 %v84, 7
  %v86 = vsub.s32 0, %v85
  %v87 = vrot.slane %v82, %v86
  %v108 = vunpack.c.l.b16 %v63
  %v109 = vunpack.c.l.b16 %v64
  %v110 = vunpack.c.l.b16 %v65
  %v111 = vunpack.c.l.b16 %v66
  %v112 = vunpack.c.l.b16 %v67
  %v113 = vunpack.c.l.b16 %v68
  %v114 = vunpack.c.l.b16 %v69
  %v115 = vunpack.c.l.b16 %v70
  %v116 = vunpack.c.l.b16 %v71
  %v117 = vunpack.c.l.b16 %v72
  %v118 = vunpack.c.l.b16 %v73
  %v119 = vunpack.c.l.b16 %v74
  %v120 = vunpack.c.l.b16 %v75
  %v121 = vunpack.c.l.b16 %v76
  %v122 = vunpack.c.l.b16 %v77
  %v123 = vunpack.c.l.b16 %v78
  %v124 = vunpack.c.l.b16 %v79
  %v125 = vunpack.c.l.b16 %v80
  %v126 = vunpack.c.l.b16 %v81
  %v127 = vpack.c.b16 %v109, %v108
  %v128 = vpack.c.b16 %v111, %v110
  %v129 = vpack.c.b16 %v113, %v112
  %v130 = vpack.c.b16 %v115, %v114
  %v131 = vpack.c.b16 %v117, %v116
  %v132 = vpack.c.b16 %v119, %v118
  %v133 = vpack.c.b16 %v121, %v120
  %v134 = vpack.c.b16 %v123, %v122
  %v135 = vpack.c.b16 %v125, %v124
  %v136 = vpack.c.b16 %v126, %v126
  %vm146 = vcmask 154624
  %v148 = vsel %vm146, %v48, 0
  %v151 = vsel %vm146, %v50, 0
  %v154 = vsel %vm146, %v52, 0
  %v157 = vsel %vm146, %v54, 0
  %v160 = vsel %vm146, %v56, 0
  %v163 = vsel %vm146, %v58, 0
  %v166 = vsel %vm146, %v60, 0
  %v169 = vsel %vm146, %v62, 0
  %vm171 = vcmask 1040384
  %vm172 = vcmask 1041408
  %v173 = vsel %vm171, 4294967295, 65535
  %v174 = vsel %vm172, %v173, 0
  %v176 = vand.u32 %v136, %v174
  %178 = vmatprep.subr.bf16.mxu0 0
  %179 = vmatpush1.bf16.msra.mxu0 %v127
  %180 = vmatprep.subr.bf16.mxu0 0
  %181 = vmatpush1.bf16.msra.mxu0 %v128
  %182 = vmatprep.subr.bf16.mxu0 0
  %183 = vmatpush1.bf16.msra.mxu0 %v129
  %184 = vmatprep.subr.bf16.mxu0 0
  %185 = vmatpush1.bf16.msra.mxu0 %v130
  %186 = vmatprep.subr.bf16.mxu0 0
  %187 = vmatpush1.bf16.msra.mxu0 %v131
  %188 = vmatprep.subr.bf16.mxu0 0
  %189 = vmatpush1.bf16.msra.mxu0 %v132
  %190 = vmatprep.subr.bf16.mxu0 0
  %191 = vmatpush1.bf16.msra.mxu0 %v133
  %192 = vmatprep.subr.bf16.mxu0 0
  %193 = vmatpush1.bf16.msra.mxu0 %v134
  %194 = vmatprep.subr.bf16.mxu0 0
  %195 = vmatpush1.bf16.msra.mxu0 %v135
  %196 = vmatprep.subr.bf16.mxu0 0
  %197 = vmatpush1.bf16.msra.mxu0 %v176
  %198 = vmatprep.subr.bf16.mxu0 0
  %199 = vmatpush1.bf16.msra.mxu0 0
  %200 = vmatprep.subr.bf16.mxu0 0
  %201 = vmatpush1.bf16.msra.mxu0 0
  %202 = vmatprep.subr.bf16.mxu0 0
  %203 = vmatpush1.bf16.msra.mxu0 0
  %204 = vmatprep.subr.bf16.mxu0 0
  %205 = vmatpush1.bf16.msra.mxu0 0
  %206 = vmatprep.subr.bf16.mxu0 0
  %207 = vmatpush1.bf16.msra.mxu0 0
  %208 = vmatprep.subr.bf16.mxu0 0
  %209 = vmatpush1.bf16.msra.mxu0 0
  %210 = vmatprep.mubr.bf16.mxu0 %v148
  %211 = vmatmul.mubr.bf16.gmra.mrb[0].mxu0 %v47
  %v212 = vpop.f32.mrb[0].mxu0
  %v213 = vadd.f32 %v87, %v212
  %v214 = vpop.f32.mrb[0].mxu0
  %v215 = vpop.f32.mrb[0].mxu0
  %v216 = vadd.f32 %v87, %v215
  %v217 = vpop.f32.mrb[0].mxu0
  %218 = vmatprep.mubr.bf16.mxu0 %v151
  %219 = vmatmul.mubr.bf16.gmra.mrb[0].mxu0 %v49
  %v220 = vpop.f32.mrb[0].mxu0
  %v221 = vadd.f32 %v87, %v220
  %v222 = vpop.f32.mrb[0].mxu0
  %v223 = vpop.f32.mrb[0].mxu0
  %v224 = vadd.f32 %v87, %v223
  %v225 = vpop.f32.mrb[0].mxu0
  %226 = vmatprep.mubr.bf16.mxu0 %v154
  %227 = vmatmul.mubr.bf16.gmra.mrb[0].mxu0 %v51
  %v228 = vpop.f32.mrb[0].mxu0
  %v229 = vadd.f32 %v87, %v228
  %v230 = vpop.f32.mrb[0].mxu0
  %v231 = vpop.f32.mrb[0].mxu0
  %v232 = vadd.f32 %v87, %v231
  %v233 = vpop.f32.mrb[0].mxu0
  %234 = vmatprep.mubr.bf16.mxu0 %v157
  %235 = vmatmul.mubr.bf16.gmra.mrb[0].mxu0 %v53
  %v236 = vpop.f32.mrb[0].mxu0
  %v237 = vadd.f32 %v87, %v236
  %v238 = vpop.f32.mrb[0].mxu0
  %v239 = vpop.f32.mrb[0].mxu0
  %v240 = vadd.f32 %v87, %v239
  %v241 = vpop.f32.mrb[0].mxu0
  %242 = vmatprep.mubr.bf16.mxu0 %v160
  %243 = vmatmul.mubr.bf16.gmra.mrb[0].mxu0 %v55
  %v244 = vpop.f32.mrb[0].mxu0
  %v245 = vadd.f32 %v87, %v244
  %v246 = vpop.f32.mrb[0].mxu0
  %v247 = vpop.f32.mrb[0].mxu0
  %v248 = vadd.f32 %v87, %v247
  %v249 = vpop.f32.mrb[0].mxu0
  %250 = vmatprep.mubr.bf16.mxu0 %v163
  %251 = vmatmul.mubr.bf16.gmra.mrb[0].mxu0 %v57
  %v252 = vpop.f32.mrb[0].mxu0
  %v253 = vadd.f32 %v87, %v252
  %v254 = vpop.f32.mrb[0].mxu0
  %v255 = vpop.f32.mrb[0].mxu0
  %v256 = vadd.f32 %v87, %v255
  %v257 = vpop.f32.mrb[0].mxu0
  %258 = vmatprep.mubr.bf16.mxu0 %v166
  %259 = vmatmul.mubr.bf16.gmra.mrb[0].mxu0 %v59
  %v260 = vpop.f32.mrb[0].mxu0
  %v261 = vadd.f32 %v87, %v260
  %v262 = vpop.f32.mrb[0].mxu0
  %v263 = vpop.f32.mrb[0].mxu0
  %v264 = vadd.f32 %v87, %v263
  %v265 = vpop.f32.mrb[0].mxu0
  %266 = vmatprep.mubr.bf16.mxu0 %v169
  %267 = vmatmul.mubr.bf16.gmra.mrb[0].mxu0 %v61
  %v268 = vpop.f32.mrb[0].mxu0
  %v269 = vadd.f32 %v87, %v268
  %v270 = vpop.f32.mrb[0].mxu0
  %v271 = vpop.f32.mrb[0].mxu0
  %v272 = vadd.f32 %v87, %v271
  %v273 = vpop.f32.mrb[0].mxu0
  %274 = vdwg.mxu0
  %vm275 = vcmask 130048
  %276 = vst.msk [vmem:[%s3] sm:$0xff] %vm275, %v213
  %277 = vst.msk [vmem:[%s3 + $0x8] sm:$0xff] %vm275, %v216
  %278 = vst.msk [vmem:[%s3 + $0x10] sm:$0xff] %vm275, %v221
  %279 = vst.msk [vmem:[%s3 + $0x18] sm:$0xff] %vm275, %v224
  %280 = vst.msk [vmem:[%s3 + $0x20] sm:$0xff] %vm275, %v229
  %281 = vst.msk [vmem:[%s3 + $0x28] sm:$0xff] %vm275, %v232
  %282 = vst.msk [vmem:[%s3 + $0x30] sm:$0xff] %vm275, %v237
  %283 = vst.msk [vmem:[%s3 + $0x38] sm:$0xff] %vm275, %v240
  %284 = vst.msk [vmem:[%s3 + $0x40] sm:$0xff] %vm275, %v245
  %285 = vst.msk [vmem:[%s3 + $0x48] sm:$0xff] %vm275, %v248
  %286 = vst.msk [vmem:[%s3 + $0x50] sm:$0xff] %vm275, %v253
  %287 = vst.msk [vmem:[%s3 + $0x58] sm:$0xff] %vm275, %v256
  %288 = vst.msk [vmem:[%s3 + $0x60] sm:$0xff] %vm275, %v261
  %289 = vst.msk [vmem:[%s3 + $0x68] sm:$0xff] %vm275, %v264
  %290 = vst.msk [vmem:[%s3 + $0x70] sm:$0xff] %vm275, %v269
  %291 = vst.msk [vmem:[%s3 + $0x78] sm:$0xff] %vm275, %v272
  // Predicated region
  $region14: #{tpu_custom_call.1} parent=0 // pred_check
    _
  $region15: #{tpu_custom_call.1} parent=0 // pred_check_branch
    %293 = sbr.rel (0) target = $region17
  $region16: #{tpu_custom_call.1} parent=0 // pred_region
    _
  $region17: #{tpu_custom_call.1} parent=0 // pred_fallthru
    _
  // Predicated region
  $region18: #{tpu_custom_call.1} parent=0 // pred_check
    _
  $region19: #{tpu_custom_call.1} parent=0 // pred_check_branch
    %295 = sbr.rel (0) target = $region21
  $region20: #{tpu_custom_call.1} parent=0 // pred_region
    _
  $region21: #{tpu_custom_call.1} parent=0 // pred_fallthru
    _

</llo_original>
